<compile_context>
chip_gen: v7x
topology: tpu7x:2x2x1
jax: 0.10.0
libtpu: 0.0.40
codegen_flags: <defaults>
</compile_context>

<pallas_src>
import jax
import jax.numpy as jnp
from jax.experimental import pallas as pl
from jax.experimental.pallas import tpu as pltpu

EPS = 1e-5


def _batchnorm1d_kernel(x_ref, gamma_ref, beta_ref, o_ref):
    # x_ref: (N, TILE_D) tile resident in VMEM; channels on the lane axis.
    x = x_ref[...].astype(jnp.float32)
    inv_n = jnp.float32(1.0 / x.shape[0])  # compile-time constant multiply

    # Centered two-pass per-channel statistics over the batch/sublane axis.
    mean = jnp.sum(x, axis=0, keepdims=True) * inv_n            # (1, TILE_D)
    centered = x - mean                                         # (N, TILE_D)
    var = jnp.sum(centered * centered, axis=0, keepdims=True) * inv_n

    # Fold affine + mean:  y = x * scale + shift
    #   scale = gamma * rsqrt(var + eps)       (rsqrt -> EUP slot)
    #   shift = beta - mean * scale
    scale = jax.lax.rsqrt(var + EPS) * gamma_ref[...].astype(jnp.float32)
    shift = beta_ref[...].astype(jnp.float32) - mean * scale
    o_ref[...] = (x * scale + shift).astype(o_ref.dtype)


def _pick_tile_d(N, D, itemsize):
    """Lane-dense channel tile keeping double-buffered in+out inside VMEM."""
    if D <= 128 or D % 128 != 0:
        # Block spanning the full channel dim (== array dim) is always legal.
        return D
    # ~48 MiB budget for 2 buffers x (input + output) tiles: fits v7x's
    # 64 MiB VMEM; v5e/v6e have equal-or-more headroom at this size.
    budget = 48 * 1024 * 1024
    max_tile = budget // max(1, 4 * N * itemsize)
    tile = min(D, max(128, (max_tile // 128) * 128))
    while D % tile != 0:
        tile -= 128
    return max(tile, 128)


def batchnorm1d(x, gamma, beta, *, tile_d=None,
                vmem_limit_bytes=64 * 1024 * 1024):
    """x: (N, D) float array; gamma/beta: (D,) affine params."""
    N, D = x.shape
    gamma2 = gamma.reshape(1, D)
    beta2 = beta.reshape(1, D)

    if tile_d is None:
        tile_d = _pick_tile_d(N, D, jnp.dtype(x.dtype).itemsize)

    grid = (pl.cdiv(D, tile_d),)

    return pl.pallas_call(
        _batchnorm1d_kernel,
        out_shape=jax.ShapeDtypeStruct((N, D), x.dtype),
        grid_spec=pltpu.PrefetchScalarGridSpec(
            num_scalar_prefetch=0,
            grid=grid,
            in_specs=[
                pl.BlockSpec((N, tile_d), lambda j: (0, j)),
                pl.BlockSpec((1, tile_d), lambda j: (0, j)),
                pl.BlockSpec((1, tile_d), lambda j: (0, j)),
            ],
            out_specs=pl.BlockSpec((N, tile_d), lambda j: (0, j)),
        ),
        compiler_params=pltpu.CompilerParams(
            # Channel tiles are independent -> shard across TensorCores (v7x).
            dimension_semantics=("parallel",),
            vmem_limit_bytes=vmem_limit_bytes,
        ),
    )(x, gamma2, beta2)


def _reference(x, gamma, beta):
    mean = jnp.mean(x, axis=0, keepdims=True)
    var = jnp.mean((x - mean) ** 2, axis=0, keepdims=True)
    return (x - mean) / jnp.sqrt(var + EPS) * gamma[None, :] + beta[None, :]


if __name__ == "__main__":
    key = jax.random.PRNGKey(0)

    # --- Test 1: toy shape matching the module's typical use (batch=8, dim=32).
    kx, kg, kb, k2 = jax.random.split(key, 4)
    N, D = 8, 32
    x = jax.random.normal(kx, (N, D), dtype=jnp.float32)
    gamma = 1.0 + 0.1 * jax.random.normal(kg, (D,), dtype=jnp.float32)
    beta = 0.1 * jax.random.normal(kb, (D,), dtype=jnp.float32)

    y = jax.block_until_ready(batchnorm1d(x, gamma, beta))
    y_ref = _reference(x, gamma, beta)
    assert jnp.allclose(y, y_ref, atol=1e-5, rtol=1e-5), "mismatch (small case)"

    # --- Test 2: lane-dense multi-tile path (D=256, TILE_D=128 -> grid=(2,)).
    kx2, kg2, kb2 = jax.random.split(k2, 3)
    N2, D2 = 16, 256
    x2 = jax.random.normal(kx2, (N2, D2), dtype=jnp.float32)
    gamma2 = 1.0 + 0.1 * jax.random.normal(kg2, (D2,), dtype=jnp.float32)
    beta2 = 0.1 * jax.random.normal(kb2, (D2,), dtype=jnp.float32)

    y2 = jax.block_until_ready(batchnorm1d(x2, gamma2, beta2, tile_d=128))
    y2_ref = _reference(x2, gamma2, beta2)
    assert jnp.allclose(y2, y2_ref, atol=1e-5, rtol=1e-5), "mismatch (tiled case)"

    print("KERNEL_OK")
</pallas_src>

<mosaic_0001>
module attributes {stable_mosaic.version = 11 : i64} {
  func.func @_batchnorm1d_kernel(%arg0: i32, %arg1: memref<8x32xf32, #tpu.memory_space<vmem>>, %arg2: memref<1x32xf32, #tpu.memory_space<vmem>>, %arg3: memref<1x32xf32, #tpu.memory_space<vmem>>, %arg4: memref<8x32xf32, #tpu.memory_space<vmem>>) attributes {dimension_semantics = [#tpu.dimension_semantics<parallel>], iteration_bounds = array<i64: 1>, scalar_prefetch = 0 : i64, scratch_operands = 0 : i64, tpu.core_type = #tpu.core_type<tc>, window_params = [{transform_indices = @transform_0, window_bounds = array<i64: 8, 32>}, {transform_indices = @transform_1, window_bounds = array<i64: 1, 32>}, {transform_indices = @transform_2, window_bounds = array<i64: 1, 32>}, {transform_indices = @transform_3, window_bounds = array<i64: 8, 32>}]} {
    %c0 = arith.constant 0 : index
    %c0_0 = arith.constant 0 : index
    %0 = vector.load %arg1[%c0, %c0_0] : memref<8x32xf32, #tpu.memory_space<vmem>>, vector<8x32xf32>
    %cst = arith.constant dense<0.000000e+00> : vector<32xf32>
    %1 = vector.multi_reduction <add>, %0, %cst [0] : vector<8x32xf32> to vector<32xf32>
    %2 = vector.shape_cast %1 : vector<32xf32> to vector<1x32xf32>
    %cst_1 = arith.constant 1.250000e-01 : f32
    %3 = vector.broadcast %cst_1 : f32 to vector<1x32xf32>
    %4 = arith.mulf %2, %3 : vector<1x32xf32>
    %5 = vector.broadcast %4 : vector<1x32xf32> to vector<8x32xf32>
    %6 = arith.subf %0, %5 : vector<8x32xf32>
    %7 = arith.mulf %6, %6 : vector<8x32xf32>
    %cst_2 = arith.constant dense<0.000000e+00> : vector<32xf32>
    %8 = vector.multi_reduction <add>, %7, %cst_2 [0] : vector<8x32xf32> to vector<32xf32>
    %9 = vector.shape_cast %8 : vector<32xf32> to vector<1x32xf32>
    %cst_3 = arith.constant 1.250000e-01 : f32
    %10 = vector.broadcast %cst_3 : f32 to vector<1x32xf32>
    %11 = arith.mulf %9, %10 : vector<1x32xf32>
    %cst_4 = arith.constant 9.99999974E-6 : f32
    %12 = vector.broadcast %cst_4 : f32 to vector<1x32xf32>
    %13 = arith.addf %11, %12 : vector<1x32xf32>
    %14 = math.rsqrt %13 : vector<1x32xf32>
    %c0_5 = arith.constant 0 : index
    %c0_6 = arith.constant 0 : index
    %15 = vector.load %arg2[%c0_5, %c0_6] : memref<1x32xf32, #tpu.memory_space<vmem>>, vector<1x32xf32>
    %16 = arith.mulf %14, %15 : vector<1x32xf32>
    %c0_7 = arith.constant 0 : index
    %c0_8 = arith.constant 0 : index
    %17 = vector.load %arg3[%c0_7, %c0_8] : memref<1x32xf32, #tpu.memory_space<vmem>>, vector<1x32xf32>
    %18 = arith.mulf %4, %16 : vector<1x32xf32>
    %19 = arith.subf %17, %18 : vector<1x32xf32>
    %20 = vector.broadcast %16 : vector<1x32xf32> to vector<8x32xf32>
    %21 = arith.mulf %0, %20 : vector<8x32xf32>
    %22 = vector.broadcast %19 : vector<1x32xf32> to vector<8x32xf32>
    %23 = arith.addf %21, %22 : vector<8x32xf32>
    %c0_9 = arith.constant 0 : index
    %c0_10 = arith.constant 0 : index
    %24 = vector.load %arg4[%c0_9, %c0_10] : memref<8x32xf32, #tpu.memory_space<vmem>>, vector<8x32xf32>
    tpu.vector_store %arg4[%c0_9, %c0_10], %23 {strides = array<i32>} : memref<8x32xf32, #tpu.memory_space<vmem>>, vector<8x32xf32>,
    return
  }
  func.func @transform_0(%arg0: i32) -> (i32, i32) {
    %c0_i32 = arith.constant 0 : i32
    %c0_i32_0 = arith.constant 0 : i32
    return %c0_i32, %arg0 : i32, i32
  }
  func.func @transform_1(%arg0: i32) -> (i32, i32) {
    %c0_i32 = arith.constant 0 : i32
    %c0_i32_0 = arith.constant 0 : i32
    return %c0_i32, %arg0 : i32, i32
  }
  func.func @transform_2(%arg0: i32) -> (i32, i32) {
    %c0_i32 = arith.constant 0 : i32
    %c0_i32_0 = arith.constant 0 : i32
    return %c0_i32, %arg0 : i32, i32
  }
  func.func @transform_3(%arg0: i32) -> (i32, i32) {
    %c0_i32 = arith.constant 0 : i32
    %c0_i32_0 = arith.constant 0 : i32
    return %c0_i32, %arg0 : i32, i32
  }
}

</mosaic_0001>

<llo_original>
// kernel: tpu_custom_call.1
$region0: #{tpu_custom_call.1}
  #allocation0 [shape = 'u32[]', space=smem, size = 0x4, offset = 0x4, fixed_abs, tag = 'smem constant byte address 0x4 - core index']
  #allocation1 [shape = 'u32[144,128]{1,0:T(1,128)}', space=vmem, size = 0x12000, scoped, tag = 'internal scratch']
  %s0 = inlined_call_operand.hbm [shape: f32[8,32], index: 0, kind: input, shape index: {}]
  %s1 = inlined_call_operand.hbm [shape: f32[1,32], index: 1, kind: input, shape index: {}]
  %s2 = inlined_call_operand.hbm [shape: f32[1,32], index: 2, kind: input, shape index: {}]
  %s3 = inlined_call_operand.hbm [shape: f32[8,32], index: 3, kind: output, shape index: {}]
  %s4 = sld [smem:[#allocation0]]
  $region34: #{tpu_custom_call.1} parent=0
    _
  %s6 = ssub.s32 1, %s4
  %s7 = scalar_select 0, %s6, %s4
  $region1: #{tpu_custom_call.1} parent=0
    #allocation2 [shape = 'u8[4096]{0}', space=vmem, size = 0x1000, scoped, tag = 'input window, operand 0, single buffered']
    #allocation3 [shape = 's32[1]{0}', space=sflag, size = 0x4, scoped, tag = 'scoped memory for tpu_custom_call.1']
    #allocation4 [shape = 's32[1]{0}', space=sflag, size = 0x4, scoped, tag = 'scoped memory for tpu_custom_call.1']
    #allocation5 [shape = 'u8[512]{0}', space=vmem, size = 0x400, scoped, tag = 'input window, operand 1, single buffered']
    #allocation6 [shape = 's32[1]{0}', space=sflag, size = 0x4, scoped, tag = 'scoped memory for tpu_custom_call.1']
    #allocation7 [shape = 'u8[512]{0}', space=vmem, size = 0x400, scoped, tag = 'input window, operand 2, single buffered']
    #allocation8 [shape = 'u8[4096]{0}', space=vmem, size = 0x1000, scoped, tag = 'output window, operand 0, single buffered']
    %8 = vsyncpa [#allocation3], 0
    %9 = vsyncpa [#allocation6], 0
    %10 = vsyncpa [#allocation4], 0
    // Predicated region
    $region2: #{tpu_custom_call.1} parent=1 // pred_check
      _
    $region3: #{tpu_custom_call.1} parent=1 // pred_check_branch
      %12 = sbr.rel (0) target = $region5
    $region4: #{tpu_custom_call.1} parent=1 // pred_region
      %s14 = ssub.s32 128, 128
      %15 = vsyncadd [#allocation3], %s14
      %s17 = sshll.u32 [#allocation2], 4
      %s18 = int_to_ptr.vmem [resolvable:$true] %s17
      %20 = dma.hbm_to_vmem [thread:$0]  %s0, 128, %s18, [#allocation3]
    $region5: #{tpu_custom_call.1} parent=1 // pred_fallthru
      _
    // Predicated region
    $region6: #{tpu_custom_call.1} parent=1 // pred_check
      _
    $region7: #{tpu_custom_call.1} parent=1 // pred_check_branch
      %22 = sbr.rel (0) target = $region9
    $region8: #{tpu_custom_call.1} parent=1 // pred_region
      %s24 = ssub.s32 16, 16
      %25 = vsyncadd [#allocation6], %s24
      %s27 = sshll.u32 [#allocation5], 4
      %s28 = int_to_ptr.vmem [resolvable:$true] %s27
      %30 = dma.hbm_to_vmem [thread:$0]  %s1, 16, %s28, [#allocation6]
    $region9: #{tpu_custom_call.1} parent=1 // pred_fallthru
      _
    // Predicated region
    $region10: #{tpu_custom_call.1} parent=1 // pred_check
      _
    $region11: #{tpu_custom_call.1} parent=1 // pred_check_branch
      %32 = sbr.rel (0) target = $region13
    $region12: #{tpu_custom_call.1} parent=1 // pred_region
      %s34 = ssub.s32 16, 16
      %35 = vsyncadd [#allocation6], %s34
      %s37 = sshll.u32 [#allocation7], 4
      %s38 = int_to_ptr.vmem [resolvable:$true] %s37
      %40 = dma.hbm_to_vmem [thread:$0]  %s2, 16, %s38, [#allocation6]
    $region13: #{tpu_custom_call.1} parent=1 // pred_fallthru
      _
    // Predicated region
    $region14: #{tpu_custom_call.1} parent=1 // pred_check
      _
    $region15: #{tpu_custom_call.1} parent=1 // pred_check_branch
      %42 = sbr.rel (0) target = $region17
    $region16: #{tpu_custom_call.1} parent=1 // pred_region
      %43 = dma.done [#allocation3], 128
    $region17: #{tpu_custom_call.1} parent=1 // pred_fallthru
      _
    // Predicated region
    $region18: #{tpu_custom_call.1} parent=1 // pred_check
      _
    $region19: #{tpu_custom_call.1} parent=1 // pred_check_branch
      %45 = sbr.rel (0) target = $region21
    $region20: #{tpu_custom_call.1} parent=1 // pred_region
      %46 = dma.done [#allocation6], 16
    $region21: #{tpu_custom_call.1} parent=1 // pred_fallthru
      _
    // Predicated region
    $region22: #{tpu_custom_call.1} parent=1 // pred_check
      _
    $region23: #{tpu_custom_call.1} parent=1 // pred_check_branch
      %48 = sbr.rel (0) target = $region25
    $region24: #{tpu_custom_call.1} parent=1 // pred_region
      %49 = dma.done [#allocation6], 16
    $region25: #{tpu_custom_call.1} parent=1 // pred_fallthru
      _
    %v50 = vld [vmem:[#allocation2] sm:$0xff]
    %vm51 = vcmask 261120
    %v52 = vsel %vm51, %v50, 0.0
    %v53 = vrot.slane %v52, 4
    %v54 = vadd.f32 %v52, %v53
    %v55 = vrot.slane %v54, 2
    %v56 = vadd.f32 %v54, %v55
    %v57 = vrot.slane %v56, 1
    %v58 = vadd.f32 %v56, %v57
    %v59 = vmul.f32 %v58, 0.125
    %v60 = vsub.f32 %v50, %v59
    %v61 = vmul.f32 %v60, %v60
    %v62 = vsel %vm51, %v61, 0.0
    %v63 = vrot.slane %v62, 4
    %v64 = vadd.f32 %v62, %v63
    %v65 = vrot.slane %v64, 2
    %v66 = vadd.f32 %v64, %v65
    %v67 = vrot.slane %v66, 1
    %v68 = vadd.f32 %v66, %v67
    %v69 = vmul.f32 %v68, 0.125
    %v70 = vadd.f32 %v69, 1e-05
    %v71 = vrsqrt.pop %v70
    %v72 = vld [vmem:[#allocation5] sm:$0x1]
    %v73 = vmul.f32 %v71, %v72
    %v74 = vld [vmem:[#allocation7] sm:$0x1]
    %v75 = vmul.f32 %v59, %v73
    %v76 = vsub.f32 %v74, %v75
    %v77 = vlaneseq
    %v78 = vshrl.u32 %v77, 7
    %v79 = vsub.s32 0, %v78
    %v80 = vrot.slane %v73, %v79
    %v81 = vmul.f32 %v50, %v80
    %v83 = vlaneseq
    %v84 = vshrl.u32 %v83, 7
    %v85 = vsub.s32 0, %v84
    %v86 = vrot.slane %v76, %v85
    %v88 = vadd.f32 %v81, %v86
    %89 = vst.msk [vmem:[#allocation8] sm:$0xff] %vm51, %v88
    // Predicated region
    $region26: #{tpu_custom_call.1} parent=1 // pred_check
      _
    $region27: #{tpu_custom_call.1} parent=1 // pred_check_branch
      %91 = sbr.rel (0) target = $region29
    $region28: #{tpu_custom_call.1} parent=1 // pred_region
      %s93 = ssub.s32 128, 128
      %94 = vsyncadd [#allocation4], %s93
      %s96 = sshll.u32 [#allocation8], 4
      %s97 = int_to_ptr.vmem [resolvable:$true] %s96
      %99 = dma.vmem_to_hbm [thread:$0]  %s97, 128, %s3, [#allocation4]
    $region29: #{tpu_custom_call.1} parent=1 // pred_fallthru
      _
    // Predicated region
    $region30: #{tpu_custom_call.1} parent=1 // pred_check
      _
    $region31: #{tpu_custom_call.1} parent=1 // pred_check_branch
      %101 = sbr.rel (0) target = $region33
    $region32: #{tpu_custom_call.1} parent=1 // pred_region
      %102 = dma.done [#allocation4], 128
    $region33: #{tpu_custom_call.1} parent=1 // pred_fallthru
      _
    %103 = vsyncpa [#allocation3], 1
    %104 = vsyncpa [#allocation6], 1
    %105 = vsyncpa [#allocation4], 1

</llo_original>
